<compile_context>
chip_gen: v5e
topology: v5e:2x2
jax: 0.10.0
libtpu: 0.0.40
codegen_flags: <defaults>
</compile_context>

<pallas_src>
import jax
import jax.numpy as jnp
from jax.experimental import pallas as pl
from jax.experimental.pallas import tpu as pltpu

INPUT_DIM = 512
H1 = 256
H2 = 128
DEFAULT_BATCH_TILE = 1024  # multiple of 256; raise to 2048 for very large B


def _round_up(x, m):
    return ((x + m - 1) // m) * m


def _mlp_kernel(x_ref, w1_ref, b1_ref, w2_ref, b2_ref, w3_ref, b3_ref, o_ref):
    # Input tile arrives as f32 straight from HBM; cast to bf16 on the VPU
    # right before the MXU (no separate XLA cast pass, no extra HBM traffic).
    x = x_ref[...].astype(jnp.bfloat16)

    # Layer 1: (tile, 512) @ (512, 256), bf16 operands, f32 MXU accumulation.
    h1 = jnp.dot(x, w1_ref[...], preferred_element_type=jnp.float32)
    h1 = jnp.maximum(h1 + b1_ref[...], 0.0)
    # TODO(synk): nn.Dropout(0.2) skipped (identity in eval mode).
    h1 = h1.astype(jnp.bfloat16)

    # Layer 2: (tile, 256) @ (256, 128). N=128 only half-fills the 256-wide MXU
    # on v6e/v7x, but this layer is ~20% of FLOPs and the kernel is input-BW /
    # overhead bound — do not restructure (e.g. pad H2) for it.
    h2 = jnp.dot(h1, w2_ref[...], preferred_element_type=jnp.float32)
    h2 = jnp.maximum(h2 + b2_ref[...], 0.0)
    h2 = h2.astype(jnp.bfloat16)

    # Layer 3: (1, 128) . (tile, 128)^T -> (1, tile): lane-dense output row.
    logits = jax.lax.dot_general(
        w3_ref[...], h2,
        dimension_numbers=(((1,), (1,)), ((), ())),
        preferred_element_type=jnp.float32,
    )
    logits = logits + b3_ref[0]  # scalar bias from SMEM
    o_ref[...] = jax.nn.sigmoid(logits).astype(o_ref.dtype)


def prepare_params(params):
    """One-time cast/reshape of the PyTorch-layout params for the kernel."""
    w1, b1, w2, b2, w3, b3 = params
    return (
        w1.astype(jnp.bfloat16),                       # (512, 256)
        b1.astype(jnp.float32).reshape(1, H1),         # (1, 256)
        w2.astype(jnp.bfloat16),                       # (256, 128)
        b2.astype(jnp.float32).reshape(1, H2),         # (1, 128)
        w3.astype(jnp.bfloat16).reshape(1, H2),        # PyTorch (out=1, in=128)
        b3.astype(jnp.float32).reshape(1,),            # scalar, lives in SMEM
    )


def _select_tile(B, max_tile):
    """Pick the batch tile.

    * Small batches: one full-extent block (no tiling constraints apply).
    * Otherwise: multiples of 256 (MXU-friendly), aiming for >= 2 grid steps
      so v7x's two TensorCores both get work, capped at max_tile.
    """
    if B <= 256:
        return B
    return min(max_tile, _round_up(pl.cdiv(B, 2), 256))


def cifar_agent_forward(features, prepared_params, *,
                        batch_tile=DEFAULT_BATCH_TILE):
    """features: (B, 512) float32. prepared_params: from prepare_params().
    Returns scores (B, 1) float32."""
    w1c, b1f, w2c, b2f, w3c, b3f = prepared_params
    B = features.shape[0]
    assert features.shape[1] == INPUT_DIM

    tile = _select_tile(B, batch_tile)
    grid = (pl.cdiv(B, tile),)  # ragged last tile handled by boundary masking

    resident = lambda shape: pl.BlockSpec(shape, lambda i: (0, 0))

    # Approximate VMEM budget (input double-buffer dominates); explicit limit
    # keeps double-buffering intact across v5e/v6e (128 MiB) and v7x (64 MiB).
    vmem_bytes = (
        2 * tile * INPUT_DIM * 4                           # x f32 double-buffer
        + 2 * tile * 4                                     # output double-buffer
        + 2 * 2 * (INPUT_DIM * H1 + H1 * H2 + H2)          # bf16 weights
        + 2 * 4 * (H1 + H2)                                # f32 biases
        + 2 * tile * (H1 + H2) * 4                         # layer temps (generous)
        + (4 << 20)                                        # compiler headroom
    )

    cost = pl.CostEstimate(
        flops=2 * B * (INPUT_DIM * H1 + H1 * H2 + H2),
        transcendentals=B,  # sigmoid
        bytes_accessed=B * INPUT_DIM * 4 + B * 4
        + 2 * (INPUT_DIM * H1 + H1 * H2 + H2) + 4 * (H1 + H2 + 1),
    )

    out_row = pl.pallas_call(
        _mlp_kernel,
        out_shape=jax.ShapeDtypeStruct((1, B), jnp.float32),
        grid_spec=pltpu.PrefetchScalarGridSpec(
            num_scalar_prefetch=0,
            grid=grid,
            in_specs=[
                # x is streamed per batch tile (f32, cast in-kernel).
                # If a profile ever shows exposed input DMA, add
                # pipeline_mode=pl.Buffered(3) here.
                pl.BlockSpec((tile, INPUT_DIM), lambda i: (i, 0)),
                resident((INPUT_DIM, H1)),                           # w1
                resident((1, H1)),                                   # b1
                resident((H1, H2)),                                  # w2
                resident((1, H2)),                                   # b2
                resident((1, H2)),                                   # w3 row
                pl.BlockSpec(memory_space=pltpu.MemorySpace.SMEM),   # b3 scalar
            ],
            out_specs=pl.BlockSpec((1, tile), lambda i: (0, i)),     # lane-dense
        ),
        compiler_params=pltpu.CompilerParams(
            dimension_semantics=("parallel",),
            vmem_limit_bytes=min(int(vmem_bytes), 64 * 1024 * 1024),
        ),
        cost_estimate=cost,
    )(features, w1c, b1f, w2c, b2f, w3c, b3f)

    # (1, B) lane-dense row -> (B, 1) column (same flat order).
    return out_row.reshape(B, 1)


def init_params(key):
    """Deterministic init mimicking PyTorch Linear (uniform(-1/sqrt(in), 1/sqrt(in)))."""
    ks = jax.random.split(key, 6)

    def lin(kw, kb, fan_in, w_shape, b_shape):
        bound = 1.0 / jnp.sqrt(fan_in)
        w = jax.random.uniform(kw, w_shape, jnp.float32, -bound, bound)
        b = jax.random.uniform(kb, b_shape, jnp.float32, -bound, bound)
        return w, b

    w1, b1 = lin(ks[0], ks[1], INPUT_DIM, (INPUT_DIM, H1), (1, H1))   # (in, out)
    w2, b2 = lin(ks[2], ks[3], H1, (H1, H2), (1, H2))                 # (in, out)
    w3, b3 = lin(ks[4], ks[5], H2, (1, H2), (1,))                     # PyTorch (out, in)
    return (w1, b1, w2, b2, w3, b3)


def _reference(features, params, compute_dtype=jnp.bfloat16):
    """Pure-JAX reference with the same bf16-operand / f32-accumulate recipe."""
    w1, b1, w2, b2, w3, b3 = params
    x = features.astype(compute_dtype)
    h1 = jnp.dot(x, w1.astype(compute_dtype), preferred_element_type=jnp.float32) + b1
    h1 = jnp.maximum(h1, 0.0).astype(compute_dtype)
    h2 = jnp.dot(h1, w2.astype(compute_dtype), preferred_element_type=jnp.float32) + b2
    h2 = jnp.maximum(h2, 0.0).astype(compute_dtype)
    logits = jnp.dot(h2, w3.astype(compute_dtype).T,
                     preferred_element_type=jnp.float32) + b3
    return jax.nn.sigmoid(logits)


if __name__ == "__main__":
    key = jax.random.PRNGKey(0)
    k_params, k_feat1, k_feat2 = jax.random.split(key, 3)
    params = init_params(k_params)
    prepared = prepare_params(params)

    # Small batch: single full-extent block, grid = 1.
    x_small = jax.random.normal(k_feat1, (8, INPUT_DIM), jnp.float32)
    out_small = jax.block_until_ready(cifar_agent_forward(x_small, prepared))
    ref_small = _reference(x_small, params)
    assert out_small.shape == (8, 1)
    assert jnp.allclose(out_small, ref_small, atol=2e-3, rtol=2e-3), "small-batch mismatch"

    # Larger batch: 2 grid steps with a ragged last tile (no jnp.pad copy).
    x_big = jax.random.normal(k_feat2, (260, INPUT_DIM), jnp.float32)
    out_big = jax.block_until_ready(cifar_agent_forward(x_big, prepared))
    ref_big = _reference(x_big, params)
    assert out_big.shape == (260, 1)
    assert jnp.allclose(out_big, ref_big, atol=2e-3, rtol=2e-3), "tiled-batch mismatch"

    print("KERNEL_OK")
</pallas_src>

<mosaic_0001>
module attributes {stable_mosaic.version = 11 : i64} {
  func.func @_mlp_kernel(%arg0: i32, %arg1: memref<8x512xf32, #tpu.memory_space<vmem>>, %arg2: memref<512x256xbf16, #tpu.memory_space<vmem>>, %arg3: memref<1x256xf32, #tpu.memory_space<vmem>>, %arg4: memref<256x128xbf16, #tpu.memory_space<vmem>>, %arg5: memref<1x128xf32, #tpu.memory_space<vmem>>, %arg6: memref<1x128xbf16, #tpu.memory_space<vmem>>, %arg7: memref<1xf32, #tpu.memory_space<smem>>, %arg8: memref<1x8xf32, #tpu.memory_space<vmem>>) attributes {dimension_semantics = [#tpu.dimension_semantics<parallel>], iteration_bounds = array<i64: 1>, scalar_prefetch = 0 : i64, scratch_operands = 0 : i64, tpu.core_type = #tpu.core_type<tc>, window_params = [{transform_indices = @transform_0, window_bounds = array<i64: 8, 512>}, {pipeline_mode = #tpu.pipeline_mode<synchronous>, transform_indices = @transform_1, window_bounds = array<i64: 512, 256>}, {pipeline_mode = #tpu.pipeline_mode<synchronous>, transform_indices = @transform_2, window_bounds = array<i64: 1, 256>}, {pipeline_mode = #tpu.pipeline_mode<synchronous>, transform_indices = @transform_3, window_bounds = array<i64: 256, 128>}, {pipeline_mode = #tpu.pipeline_mode<synchronous>, transform_indices = @transform_4, window_bounds = array<i64: 1, 128>}, {pipeline_mode = #tpu.pipeline_mode<synchronous>, transform_indices = @transform_5, window_bounds = array<i64: 1, 128>}, {transform_indices = @transform_6, window_bounds = array<i64: 1>}, {transform_indices = @transform_7, window_bounds = array<i64: 1, 8>}]} {
    %c0 = arith.constant 0 : index
    %c0_0 = arith.constant 0 : index
    %0 = vector.load %arg1[%c0, %c0_0] : memref<8x512xf32, #tpu.memory_space<vmem>>, vector<8x512xf32>
    %1 = arith.truncf %0 : vector<8x512xf32> to vector<8x512xbf16>
    %c0_1 = arith.constant 0 : index
    %c0_2 = arith.constant 0 : index
    %2 = vector.load %arg2[%c0_1, %c0_2] : memref<512x256xbf16, #tpu.memory_space<vmem>>, vector<512x256xbf16>
    %cst = arith.constant dense<0.000000e+00> : vector<8x256xf32>
    %3 = tpu.matmul %1, %2, %cst {dimension_numbers = #tpu.dot_dimension_numbers<[1], [0], [0], [1], [0, 0, 1, 1], [], []>} : vector<8x512xbf16>, vector<512x256xbf16>, vector<8x256xf32> -> vector<8x256xf32>
    %c0_3 = arith.constant 0 : index
    %c0_4 = arith.constant 0 : index
    %4 = vector.load %arg3[%c0_3, %c0_4] : memref<1x256xf32, #tpu.memory_space<vmem>>, vector<1x256xf32>
    %5 = vector.broadcast %4 : vector<1x256xf32> to vector<8x256xf32>
    %6 = arith.addf %3, %5 : vector<8x256xf32>
    %cst_5 = arith.constant 0.000000e+00 : f32
    %7 = vector.broadcast %cst_5 : f32 to vector<8x256xf32>
    %8 = arith.maximumf %6, %7 : vector<8x256xf32>
    %9 = arith.truncf %8 : vector<8x256xf32> to vector<8x256xbf16>
    %c0_6 = arith.constant 0 : index
    %c0_7 = arith.constant 0 : index
    %10 = vector.load %arg4[%c0_6, %c0_7] : memref<256x128xbf16, #tpu.memory_space<vmem>>, vector<256x128xbf16>
    %cst_8 = arith.constant dense<0.000000e+00> : vector<8x128xf32>
    %11 = tpu.matmul %9, %10, %cst_8 {dimension_numbers = #tpu.dot_dimension_numbers<[1], [0], [0], [1], [0, 0, 1, 1], [], []>} : vector<8x256xbf16>, vector<256x128xbf16>, vector<8x128xf32> -> vector<8x128xf32>
    %c0_9 = arith.constant 0 : index
    %c0_10 = arith.constant 0 : index
    %12 = vector.load %arg5[%c0_9, %c0_10] : memref<1x128xf32, #tpu.memory_space<vmem>>, vector<1x128xf32>
    %13 = vector.broadcast %12 : vector<1x128xf32> to vector<8x128xf32>
    %14 = arith.addf %11, %13 : vector<8x128xf32>
    %cst_11 = arith.constant 0.000000e+00 : f32
    %15 = vector.broadcast %cst_11 : f32 to vector<8x128xf32>
    %16 = arith.maximumf %14, %15 : vector<8x128xf32>
    %17 = arith.truncf %16 : vector<8x128xf32> to vector<8x128xbf16>
    %c0_12 = arith.constant 0 : index
    %c0_13 = arith.constant 0 : index
    %18 = vector.load %arg6[%c0_12, %c0_13] : memref<1x128xbf16, #tpu.memory_space<vmem>>, vector<1x128xbf16>
    %cst_14 = arith.constant dense<0.000000e+00> : vector<1x8xf32>
    %19 = tpu.matmul %18, %17, %cst_14 {dimension_numbers = #tpu.dot_dimension_numbers<[1], [1], [0], [0], [0, 0, 1, 0], [], []>} : vector<1x128xbf16>, vector<8x128xbf16>, vector<1x8xf32> -> vector<1x8xf32>
    %c0_15 = arith.constant 0 : index
    %20 = memref.load %arg7[%c0_15] : memref<1xf32, #tpu.memory_space<smem>>
    %21 = vector.broadcast %20 : f32 to vector<1x8xf32>
    %22 = arith.addf %19, %21 : vector<1x8xf32>
    %23 = arith.negf %22 : vector<1x8xf32>
    %24 = math.exp %23 : vector<1x8xf32>
    %cst_16 = arith.constant 1.000000e+00 : f32
    %25 = vector.broadcast %cst_16 : f32 to vector<1x8xf32>
    %26 = arith.addf %25, %24 : vector<1x8xf32>
    %27 = arith.divf %25, %26 : vector<1x8xf32>
    %c0_17 = arith.constant 0 : index
    %c0_18 = arith.constant 0 : index
    %28 = vector.load %arg8[%c0_17, %c0_18] : memref<1x8xf32, #tpu.memory_space<vmem>>, vector<1x8xf32>
    tpu.vector_store %arg8[%c0_17, %c0_18], %27 {strides = array<i32>} : memref<1x8xf32, #tpu.memory_space<vmem>>, vector<1x8xf32>,
    return
  }
  func.func @transform_0(%arg0: i32) -> (i32, i32) {
    %c0_i32 = arith.constant 0 : i32
    %c0_i32_0 = arith.constant 0 : i32
    return %arg0, %c0_i32 : i32, i32
  }
  func.func @transform_1(%arg0: i32) -> (i32, i32) {
    %c0_i32 = arith.constant 0 : i32
    %c0_i32_0 = arith.constant 0 : i32
    %c0_i32_1 = arith.constant 0 : i32
    return %c0_i32, %c0_i32_0 : i32, i32
  }
  func.func @transform_2(%arg0: i32) -> (i32, i32) {
    %c0_i32 = arith.constant 0 : i32
    %c0_i32_0 = arith.constant 0 : i32
    %c0_i32_1 = arith.constant 0 : i32
    return %c0_i32, %c0_i32_0 : i32, i32
  }
  func.func @transform_3(%arg0: i32) -> (i32, i32) {
    %c0_i32 = arith.constant 0 : i32
    %c0_i32_0 = arith.constant 0 : i32
    %c0_i32_1 = arith.constant 0 : i32
    return %c0_i32, %c0_i32_0 : i32, i32
  }
  func.func @transform_4(%arg0: i32) -> (i32, i32) {
    %c0_i32 = arith.constant 0 : i32
    %c0_i32_0 = arith.constant 0 : i32
    %c0_i32_1 = arith.constant 0 : i32
    return %c0_i32, %c0_i32_0 : i32, i32
  }
  func.func @transform_5(%arg0: i32) -> (i32, i32) {
    %c0_i32 = arith.constant 0 : i32
    %c0_i32_0 = arith.constant 0 : i32
    %c0_i32_1 = arith.constant 0 : i32
    return %c0_i32, %c0_i32_0 : i32, i32
  }
  func.func @transform_6(%arg0: i32) -> i32 {
    %c0_i32 = arith.constant 0 : i32
    %c0_i32_0 = arith.constant 0 : i32
    return %c0_i32 : i32
  }
  func.func @transform_7(%arg0: i32) -> (i32, i32) {
    %c0_i32 = arith.constant 0 : i32
    %c0_i32_0 = arith.constant 0 : i32
    return %c0_i32, %arg0 : i32, i32
  }
}

</mosaic_0001>

<llo_original>
// kernel: tpu_custom_call.1
$region0: #{tpu_custom_call.1}
  #allocation0 [shape = 'u32[]', space=smem, size = 0x4, offset = 0x4, fixed_abs, tag = 'smem constant byte address 0x4 - core index']
  #allocation1 [shape = 'u32[72,128]{1,0:T(1,128)}', space=vmem, size = 0x9000, scoped, tag = 'internal scratch']
  #allocation2 [shape = 'f32[1]{0:T(128)S(6)}', space=smem, size = 0x200, scoped, tag = 'scoped memory for tpu_custom_call.1']
  %s0 = inlined_call_operand.hbm [shape: f32[8,512], index: 0, kind: input, shape index: {}]
  %s1 = inlined_call_operand.hbm [shape: bf16[512,256], index: 1, kind: input, shape index: {}]
  %s2 = inlined_call_operand.vmem [shape: f32[1,256], index: 2, kind: input, shape index: {}]
  %s3 = inlined_call_operand.hbm [shape: bf16[256,128], index: 3, kind: input, shape index: {}]
  %s4 = inlined_call_operand.vmem [shape: f32[1,128], index: 4, kind: input, shape index: {}]
  %s5 = inlined_call_operand.vmem [shape: bf16[1,128], index: 5, kind: input, shape index: {}]
  %s6 = inlined_call_operand.<no memory space> [shape: f32[1], index: 6, kind: input, shape index: {}]
  %s7 = inlined_call_operand.hbm [shape: f32[1,8], index: 7, kind: output, shape index: {}]
  %s8 = sld [smem:[#allocation0]]
  $region50: #{tpu_custom_call.1} parent=0
    _
  %s10 = ssub.s32 1, %s8
  %s11 = scalar_select 0, %s10, %s8
  %12 = sst [smem:[#allocation2]] %s6
  $region1: #{tpu_custom_call.1} parent=0
    #allocation3 [shape = 'u8[16384]{0}', space=vmem, size = 0x4000, scoped, tag = 'input window, operand 0, single buffered']
    #allocation4 [shape = 's32[1]{0}', space=sflag, size = 0x4, scoped, tag = 'scoped memory for tpu_custom_call.1']
    #allocation5 [shape = 's32[1]{0}', space=sflag, size = 0x4, scoped, tag = 'scoped memory for tpu_custom_call.1']
    #allocation6 [shape = 'u8[262144]{0}', space=vmem, size = 0x40000, scoped, tag = 'input window, operand 1, single buffered']
    #allocation7 [shape = 's32[1]{0}', space=sflag, size = 0x4, scoped, tag = 'scoped memory for tpu_custom_call.1']
    #allocation8 [shape = 'u8[65536]{0}', space=vmem, size = 0x10000, scoped, tag = 'input window, operand 3, single buffered']
    #allocation9 [shape = 'u8[512]{0}', space=vmem, size = 0x400, scoped, tag = 'output window, operand 0, single buffered']
    %13 = vsyncpa [#allocation4], 0
    %14 = vsyncpa [#allocation7], 0
    %15 = vsyncpa [#allocation5], 0
    // Predicated region
    $region2: #{tpu_custom_call.1} parent=1 // pred_check
      _
    $region3: #{tpu_custom_call.1} parent=1 // pred_check_branch
      %17 = sbr.rel (0) target = $region5
    $region4: #{tpu_custom_call.1} parent=1 // pred_region
      %19 = vsyncadd [#allocation4], 0
      %s21 = sshll.u32 %s0, 4
      %s22 = int_to_ptr.hbm [resolvable:$true] %s21
      %s23 = sshll.u32 [#allocation3], 4
      %s24 = int_to_ptr.vmem [resolvable:$true] %s23
      %26 = dma.hbm_to_vmem [thread:$0]  %s22, 512, %s24, [#allocation4]
    $region5: #{tpu_custom_call.1} parent=1 // pred_fallthru
      _
    // Predicated region
    $region6: #{tpu_custom_call.1} parent=1 // pred_check
      _
    $region7: #{tpu_custom_call.1} parent=1 // pred_check_branch
      %28 = sbr.rel (0) target = $region9
    $region8: #{tpu_custom_call.1} parent=1 // pred_region
      %30 = vsyncadd [#allocation7], 0
      %s31 = sshll.u32 %s1, 4
      %s32 = int_to_ptr.hbm [resolvable:$true] %s31
      %s33 = sshll.u32 [#allocation6], 4
      %s34 = int_to_ptr.vmem [resolvable:$true] %s33
      %39 = dma.hbm_to_vmem [thread:$0]  %s32, 8192, %s34, [#allocation7], 128, 128, 8
    $region9: #{tpu_custom_call.1} parent=1 // pred_fallthru
      _
    // Predicated region
    $region10: #{tpu_custom_call.1} parent=1 // pred_check
      _
    $region11: #{tpu_custom_call.1} parent=1 // pred_check_branch
      %41 = sbr.rel (0) target = $region13
    $region12: #{tpu_custom_call.1} parent=1 // pred_region
      _
    $region13: #{tpu_custom_call.1} parent=1 // pred_fallthru
      _
    // Predicated region
    $region14: #{tpu_custom_call.1} parent=1 // pred_check
      _
    $region15: #{tpu_custom_call.1} parent=1 // pred_check_branch
      %43 = sbr.rel (0) target = $region17
    $region16: #{tpu_custom_call.1} parent=1 // pred_region
      %45 = vsyncadd [#allocation7], 0
      %s46 = sshll.u32 %s3, 4
      %s47 = int_to_ptr.hbm [resolvable:$true] %s46
      %s48 = sshll.u32 [#allocation8], 4
      %s49 = int_to_ptr.vmem [resolvable:$true] %s48
      %54 = dma.hbm_to_vmem [thread:$0]  %s47, 2048, %s49, [#allocation7], 64, 64, 4
    $region17: #{tpu_custom_call.1} parent=1 // pred_fallthru
      _
    // Predicated region
    $region18: #{tpu_custom_call.1} parent=1 // pred_check
      _
    $region19: #{tpu_custom_call.1} parent=1 // pred_check_branch
      %56 = sbr.rel (0) target = $region21
    $region20: #{tpu_custom_call.1} parent=1 // pred_region
      _
    $region21: #{tpu_custom_call.1} parent=1 // pred_fallthru
      _
    // Predicated region
    $region22: #{tpu_custom_call.1} parent=1 // pred_check
      _
    $region23: #{tpu_custom_call.1} parent=1 // pred_check_branch
      %58 = sbr.rel (0) target = $region25
    $region24: #{tpu_custom_call.1} parent=1 // pred_region
      _
    $region25: #{tpu_custom_call.1} parent=1 // pred_fallthru
      _
    // Predicated region
    $region26: #{tpu_custom_call.1} parent=1 // pred_check
      _
    $region27: #{tpu_custom_call.1} parent=1 // pred_check_branch
      %60 = sbr.rel (0) target = $region29
    $region28: #{tpu_custom_call.1} parent=1 // pred_region
      _
    $region29: #{tpu_custom_call.1} parent=1 // pred_fallthru
      _
    // Predicated region
    $region30: #{tpu_custom_call.1} parent=1 // pred_check
      _
    $region31: #{tpu_custom_call.1} parent=1 // pred_check_branch
      %62 = sbr.rel (0) target = $region33
    $region32: #{tpu_custom_call.1} parent=1 // pred_region
      %64 = dma.done [#allocation4], 512
    $region33: #{tpu_custom_call.1} parent=1 // pred_fallthru
      _
    // Predicated region
    $region34: #{tpu_custom_call.1} parent=1 // pred_check
      _
    $region35: #{tpu_custom_call.1} parent=1 // pred_check_branch
      %66 = sbr.rel (0) target = $region37
    $region36: #{tpu_custom_call.1} parent=1 // pred_region
      %68 = dma.done [#allocation7], 8192
    $region37: #{tpu_custom_call.1} parent=1 // pred_fallthru
      _
    // Predicated region
    $region38: #{tpu_custom_call.1} parent=1 // pred_check
      _
    $region39: #{tpu_custom_call.1} parent=1 // pred_check_branch
      %70 = sbr.rel (0) target = $region41
    $region40: #{tpu_custom_call.1} parent=1 // pred_region
      %72 = dma.done [#allocation7], 2048
    $region41: #{tpu_custom_call.1} parent=1 // pred_fallthru
      _
    %v74 = vld [vmem:[#allocation3] sm:$0xff]
    %v75 = vld [vmem:[#allocation3 + $0x8] sm:$0xff]
    %v76 = vld [vmem:[#allocation3 + $0x10] sm:$0xff]
    %v77 = vld [vmem:[#allocation3 + $0x18] sm:$0xff]
    %v78 = vpack.c.bf16 %v74, %v74
    %v79 = vpack.c.bf16 %v75, %v75
    %v80 = vpack.c.bf16 %v76, %v76
    %v81 = vpack.c.bf16 %v77, %v77
    %v82 = vld [vmem:[#allocation6] sm:$0xff]
    %v83 = vld [vmem:[#allocation6 + $0x8] sm:$0xff]
    %v84 = vld [vmem:[#allocation6 + $0x10] sm:$0xff]
    %v85 = vld [vmem:[#allocation6 + $0x18] sm:$0xff]
    %v86 = vld [vmem:[#allocation6 + $0x20] sm:$0xff]
    %v87 = vld [vmem:[#allocation6 + $0x28] sm:$0xff]
    %v88 = vld [vmem:[#allocation6 + $0x30] sm:$0xff]
    %v89 = vld [vmem:[#allocation6 + $0x38] sm:$0xff]
    %v90 = vld [vmem:[#allocation6 + $0x40] sm:$0xff]
    %v91 = vld [vmem:[#allocation6 + $0x48] sm:$0xff]
    %v92 = vld [vmem:[#allocation6 + $0x50] sm:$0xff]
    %v93 = vld [vmem:[#allocation6 + $0x58] sm:$0xff]
    %v94 = vld [vmem:[#allocation6 + $0x60] sm:$0xff]
    %v95 = vld [vmem:[#allocation6 + $0x68] sm:$0xff]
    %v96 = vld [vmem:[#allocation6 + $0x70] sm:$0xff]
    %v97 = vld [vmem:[#allocation6 + $0x78] sm:$0xff]
    %v98 = vld [vmem:[#allocation6 + $0x80] sm:$0xff]
    %v99 = vld [vmem:[#allocation6 + $0x88] sm:$0xff]
    %v100 = vld [vmem:[#allocation6 + $0x90] sm:$0xff]
    %v101 = vld [vmem:[#allocation6 + $0x98] sm:$0xff]
    %v102 = vld [vmem:[#allocation6 + $0xa0] sm:$0xff]
    %v103 = vld [vmem:[#allocation6 + $0xa8] sm:$0xff]
    %v104 = vld [vmem:[#allocation6 + $0xb0] sm:$0xff]
    %v105 = vld [vmem:[#allocation6 + $0xb8] sm:$0xff]
    %v106 = vld [vmem:[#allocation6 + $0xc0] sm:$0xff]
    %v107 = vld [vmem:[#allocation6 + $0xc8] sm:$0xff]
    %v108 = vld [vmem:[#allocation6 + $0xd0] sm:$0xff]
    %v109 = vld [vmem:[#allocation6 + $0xd8] sm:$0xff]
    %v110 = vld [vmem:[#allocation6 + $0xe0] sm:$0xff]
    %v111 = vld [vmem:[#allocation6 + $0xe8] sm:$0xff]
    %v112 = vld [vmem:[#allocation6 + $0xf0] sm:$0xff]
    %v113 = vld [vmem:[#allocation6 + $0xf8] sm:$0xff]
    %v114 = vld [vmem:[#allocation6 + $0x100] sm:$0xff]
    %v115 = vld [vmem:[#allocation6 + $0x108] sm:$0xff]
    %v116 = vld [vmem:[#allocation6 + $0x110] sm:$0xff]
    %v117 = vld [vmem:[#allocation6 + $0x118] sm:$0xff]
    %v118 = vld [vmem:[#allocation6 + $0x120] sm:$0xff]
    %v119 = vld [vmem:[#allocation6 + $0x128] sm:$0xff]
    %v120 = vld [vmem:[#allocation6 + $0x130] sm:$0xff]
    %v121 = vld [vmem:[#allocation6 + $0x138] sm:$0xff]
    %v122 = vld [vmem:[#allocation6 + $0x140] sm:$0xff]
    %v123 = vld [vmem:[#allocation6 + $0x148] sm:$0xff]
    %v124 = vld [vmem:[#allocation6 + $0x150] sm:$0xff]
    %v125 = vld [vmem:[#allocation6 + $0x158] sm:$0xff]
    %v126 = vld [vmem:[#allocation6 + $0x160] sm:$0xff]
    %v127 = vld [vmem:[#allocation6 + $0x168] sm:$0xff]
    %v128 = vld [vmem:[#allocation6 + $0x170] sm:$0xff]
    %v129 = vld [vmem:[#allocation6 + $0x178] sm:$0xff]
    %v130 = vld [vmem:[#allocation6 + $0x180] sm:$0xff]
    %v131 = vld [vmem:[#allocation6 + $0x188] sm:$0xff]
    %v132 = vld [vmem:[#allocation6 + $0x190] sm:$0xff]
    %v133 = vld [vmem:[#allocation6 + $0x198] sm:$0xff]
    %v134 = vld [vmem:[#allocation6 + $0x1a0] sm:$0xff]
    %v135 = vld [vmem:[#allocation6 + $0x1a8] sm:$0xff]
    %v136 = vld [vmem:[#allocation6 + $0x1b0] sm:$0xff]
    %v137 = vld [vmem:[#allocation6 + $0x1b8] sm:$0xff]
    %v138 = vld [vmem:[#allocation6 + $0x1c0] sm:$0xff]
    %v139 = vld [vmem:[#allocation6 + $0x1c8] sm:$0xff]
    %v140 = vld [vmem:[#allocation6 + $0x1d0] sm:$0xff]
    %v141 = vld [vmem:[#allocation6 + $0x1d8] sm:$0xff]
    %v142 = vld [vmem:[#allocation6 + $0x1e0] sm:$0xff]
    %v143 = vld [vmem:[#allocation6 + $0x1e8] sm:$0xff]
    %v144 = vld [vmem:[#allocation6 + $0x1f0] sm:$0xff]
    %v145 = vld [vmem:[#allocation6 + $0x1f8] sm:$0xff]
    %v146 = vld [vmem:[%s2] sm:$0x3]
    %v148 = vperm.slane %v146, 0
    %v149 = vperm.slane %v146, 1
    %v216 = vunpack.c.l.b16 %v82
    %v217 = vunpack.c.h.b16 %v82
    %v218 = vunpack.c.l.b16 %v83
    %v219 = vunpack.c.h.b16 %v83
    %v220 = vunpack.c.l.b16 %v84
    %v221 = vunpack.c.h.b16 %v84
    %v222 = vunpack.c.l.b16 %v85
    %v223 = vunpack.c.h.b16 %v85
    %v224 = vunpack.c.l.b16 %v86
    %v225 = vunpack.c.h.b16 %v86
    %v226 = vunpack.c.l.b16 %v87
    %v227 = vunpack.c.h.b16 %v87
    %v228 = vunpack.c.l.b16 %v88
    %v229 = vunpack.c.h.b16 %v88
    %v230 = vunpack.c.l.b16 %v89
    %v231 = vunpack.c.h.b16 %v89
    %v232 = vunpack.c.l.b16 %v90
    %v233 = vunpack.c.h.b16 %v90
    %v234 = vunpack.c.l.b16 %v91
    %v235 = vunpack.c.h.b16 %v91
    %v236 = vunpack.c.l.b16 %v92
    %v237 = vunpack.c.h.b16 %v92
    %v238 = vunpack.c.l.b16 %v93
    %v239 = vunpack.c.h.b16 %v93
    %v240 = vunpack.c.l.b16 %v94
    %v241 = vunpack.c.h.b16 %v94
    %v242 = vunpack.c.l.b16 %v95
    %v243 = vunpack.c.h.b16 %v95
    %v244 = vunpack.c.l.b16 %v96
    %v245 = vunpack.c.h.b16 %v96
    %v246 = vunpack.c.l.b16 %v97
    %v247 = vunpack.c.h.b16 %v97
    %v248 = vunpack.c.l.b16 %v98
    %v249 = vunpack.c.h.b16 %v98
    %v250 = vunpack.c.l.b16 %v99
    %v251 = vunpack.c.h.b16 %v99
    %v252 = vunpack.c.l.b16 %v100
    %v253 = vunpack.c.h.b16 %v100
    %v254 = vunpack.c.l.b16 %v101
    %v255 = vunpack.c.h.b16 %v101
    %v256 = vunpack.c.l.b16 %v102
    %v257 = vunpack.c.h.b16 %v102
    %v258 = vunpack.c.l.b16 %v103
    %v259 = vunpack.c.h.b16 %v103
    %v260 = vunpack.c.l.b16 %v104
    %v261 = vunpack.c.h.b16 %v104
    %v262 = vunpack.c.l.b16 %v105
    %v263 = vunpack.c.h.b16 %v105
    %v264 = vunpack.c.l.b16 %v106
    %v265 = vunpack.c.h.b16 %v106
    %v266 = vunpack.c.l.b16 %v107
    %v267 = vunpack.c.h.b16 %v107
    %v268 = vunpack.c.l.b16 %v108
    %v269 = vunpack.c.h.b16 %v108
    %v270 = vunpack.c.l.b16 %v109
    %v271 = vunpack.c.h.b16 %v109
    %v272 = vunpack.c.l.b16 %v110
    %v273 = vunpack.c.h.b16 %v110
    %v274 = vunpack.c.l.b16 %v111
    %v275 = vunpack.c.h.b16 %v111
    %v276 = vunpack.c.l.b16 %v112
    %v277 = vunpack.c.h.b16 %v112
    %v278 = vunpack.c.l.b16 %v113
    %v279 = vunpack.c.h.b16 %v113
    %v280 = vunpack.c.l.b16 %v114
    %v281 = vunpack.c.h.b16 %v114
    %v282 = vunpack.c.l.b16 %v115
    %v283 = vunpack.c.h.b16 %v115
    %v284 = vunpack.c.l.b16 %v116
    %v285 = vunpack.c.h.b16 %v116
    %v286 = vunpack.c.l.b16 %v117
    %v287 = vunpack.c.h.b16 %v117
    %v288 = vunpack.c.l.b16 %v118
    %v289 = vunpack.c.h.b16 %v118
    %v290 = vunpack.c.l.b16 %v119
    %v291 = vunpack.c.h.b16 %v119
    %v292 = vunpack.c.l.b16 %v120
    %v293 = vunpack.c.h.b16 %v120
    %v294 = vunpack.c.l.b16 %v121
    %v295 = vunpack.c.h.b16 %v121
    %v296 = vunpack.c.l.b16 %v122
    %v297 = vunpack.c.h.b16 %v122
    %v298 = vunpack.c.l.b16 %v123
    %v299 = vunpack.c.h.b16 %v123
    %v300 = vunpack.c.l.b16 %v124
    %v301 = vunpack.c.h.b16 %v124
    %v302 = vunpack.c.l.b16 %v125
    %v303 = vunpack.c.h.b16 %v125
    %v304 = vunpack.c.l.b16 %v126
    %v305 = vunpack.c.h.b16 %v126
    %v306 = vunpack.c.l.b16 %v127
    %v307 = vunpack.c.h.b16 %v127
    %v308 = vunpack.c.l.b16 %v128
    %v309 = vunpack.c.h.b16 %v128
    %v310 = vunpack.c.l.b16 %v129
    %v311 = vunpack.c.h.b16 %v129
    %v312 = vunpack.c.l.b16 %v130
    %v313 = vunpack.c.h.b16 %v130
    %v314 = vunpack.c.l.b16 %v131
    %v315 = vunpack.c.h.b16 %v131
    %v316 = vunpack.c.l.b16 %v132
    %v317 = vunpack.c.h.b16 %v132
    %v318 = vunpack.c.l.b16 %v133
    %v319 = vunpack.c.h.b16 %v133
    %v320 = vunpack.c.l.b16 %v134
    %v321 = vunpack.c.h.b16 %v134
    %v322 = vunpack.c.l.b16 %v135
    %v323 = vunpack.c.h.b16 %v135
    %v324 = vunpack.c.l.b16 %v136
    %v325 = vunpack.c.h.b16 %v136
    %v326 = vunpack.c.l.b16 %v137
    %v327 = vunpack.c.h.b16 %v137
    %v328 = vunpack.c.l.b16 %v138
    %v329 = vunpack.c.h.b16 %v138
    %v330 = vunpack.c.l.b16 %v139
    %v331 = vunpack.c.h.b16 %v139
    %v332 = vunpack.c.l.b16 %v140
    %v333 = vunpack.c.h.b16 %v140
    %v334 = vunpack.c.l.b16 %v141
    %v335 = vunpack.c.h.b16 %v141
    %v336 = vunpack.c.l.b16 %v142
    %v337 = vunpack.c.h.b16 %v142
    %v338 = vunpack.c.l.b16 %v143
    %v339 = vunpack.c.h.b16 %v143
    %v340 = vunpack.c.l.b16 %v144
    %v341 = vunpack.c.h.b16 %v144
    %v342 = vunpack.c.l.b16 %v145
    %v343 = vunpack.c.h.b16 %v145
    %v344 = vpack.c.b16 %v218, %v216
    %v345 = vpack.c.b16 %v219, %v217
    %v346 = vpack.c.b16 %v222, %v220
    %v347 = vpack.c.b16 %v223, %v221
    %v348 = vpack.c.b16 %v226, %v224
    %v349 = vpack.c.b16 %v227, %v225
    %v350 = vpack.c.b16 %v230, %v228
    %v351 = vpack.c.b16 %v231, %v229
    %v352 = vpack.c.b16 %v234, %v232
    %v353 = vpack.c.b16 %v235, %v233
    %v354 = vpack.c.b16 %v238, %v236
    %v355 = vpack.c.b16 %v239, %v237
    %v356 = vpack.c.b16 %v242, %v240
    %v357 = vpack.c.b16 %v243, %v241
    %v358 = vpack.c.b16 %v246, %v244
    %v359 = vpack.c.b16 %v247, %v245
    %v360 = vpack.c.b16 %v250, %v248
    %v361 = vpack.c.b16 %v251, %v249
    %v362 = vpack.c.b16 %v254, %v252
    %v363 = vpack.c.b16 %v255, %v253
    %v364 = vpack.c.b16 %v258, %v256
    %v365 = vpack.c.b16 %v259, %v257
    %v366 = vpack.c.b16 %v262, %v260
    %v367 = vpack.c.b16 %v263, %v261
    %v368 = vpack.c.b16 %v266, %v264
    %v369 = vpack.c.b16 %v267, %v265
    %v370 = vpack.c.b16 %v270, %v268
    %v371 = vpack.c.b16 %v271, %v269
    %v372 = vpack.c.b16 %v274, %v272
    %v373 = vpack.c.b16 %v275, %v273
    %v374 = vpack.c.b16 %v278, %v276
    %v375 = vpack.c.b16 %v279, %v277
    %v376 = vpack.c.b16 %v282, %v280
    %v377 = vpack.c.b16 %v283, %v281
    %v378 = vpack.c.b16 %v286, %v284
    %v379 = vpack.c.b16 %v287, %v285
    %v380 = vpack.c.b16 %v290, %v288
    %v381 = vpack.c.b16 %v291, %v289
    %v382 = vpack.c.b16 %v294, %v292
    %v383 = vpack.c.b16 %v295, %v293
    %v384 = vpack.c.b16 %v298, %v296
    %v385 = vpack.c.b16 %v299, %v297
    %v386 = vpack.c.b16 %v302, %v300
    %v387 = vpack.c.b16 %v303, %v301
    %v388 = vpack.c.b16 %v306, %v304
    %v389 = vpack.c.b16 %v307, %v305
    %v390 = vpack.c.b16 %v310, %v308
    %v391 = vpack.c.b16 %v311, %v309
    %v392 = vpack.c.b16 %v314, %v312
    %v393 = vpack.c.b16 %v315, %v313
    %v394 = vpack.c.b16 %v318, %v316
    %v395 = vpack.c.b16 %v319, %v317
    %v396 = vpack.c.b16 %v322, %v320
    %v397 = vpack.c.b16 %v323, %v321
    %v398 = vpack.c.b16 %v326, %v324
    %v399 = vpack.c.b16 %v327, %v325
    %v400 = vpack.c.b16 %v330, %v328
    %v401 = vpack.c.b16 %v331, %v329
    %v402 = vpack.c.b16 %v334, %v332
    %v403 = vpack.c.b16 %v335, %v333
    %v404 = vpack.c.b16 %v338, %v336
    %v405 = vpack.c.b16 %v339, %v337
    %v406 = vpack.c.b16 %v342, %v340
    %v407 = vpack.c.b16 %v343, %v341
    %472 = vmatpush.bf16.msra.mxu0 %v358
    %473 = vmatpush.bf16.msra.mxu0 %v356
    %474 = vmatpush.bf16.msra.mxu0 %v354
    %475 = vmatpush.bf16.msra.mxu0 %v352
    %476 = vmatpush.bf16.msra.mxu0 %v350
    %477 = vmatpush.bf16.msra.mxu0 %v348
    %478 = vmatpush.bf16.msra.mxu0 %v346
    %479 = vmatpush.bf16.msra.mxu0 %v344
    %480 = vmatmul.bf16.gmra.mxu0 %v78
    %v481 = vpop.f32.mrf.mxu0
    %v482 = vadd.f32 %v148, %v481
    %v483 = vpop.f32.mrf.mxu0
    %484 = vdwg.mxu0
    %485 = vmatpush.bf16.msra.mxu0 %v374
    %486 = vmatpush.bf16.msra.mxu0 %v372
    %487 = vmatpush.bf16.msra.mxu0 %v370
    %488 = vmatpush.bf16.msra.mxu0 %v368
    %489 = vmatpush.bf16.msra.mxu0 %v366
    %490 = vmatpush.bf16.msra.mxu0 %v364
    %491 = vmatpush.bf16.msra.mxu0 %v362
    %492 = vmatpush.bf16.msra.mxu0 %v360
    %493 = vmatmul.bf16.gmra.mxu0 %v79
    %v494 = vpop.f32.mrf.mxu0
    %v495 = vadd.f32 %v482, %v494
    %v496 = vpop.f32.mrf.mxu0
    %497 = vdwg.mxu0
    %498 = vmatpush.bf16.msra.mxu0 %v390
    %499 = vmatpush.bf16.msra.mxu0 %v388
    %500 = vmatpush.bf16.msra.mxu0 %v386
    %501 = vmatpush.bf16.msra.mxu0 %v384
    %502 = vmatpush.bf16.msra.mxu0 %v382
    %503 = vmatpush.bf16.msra.mxu0 %v380
    %504 = vmatpush.bf16.msra.mxu0 %v378
    %505 = vmatpush.bf16.msra.mxu0 %v376
    %506 = vmatmul.bf16.gmra.mxu0 %v80
    %v507 = vpop.f32.mrf.mxu0
    %v508 = vadd.f32 %v495, %v507
    %v509 = vpop.f32.mrf.mxu0
    %510 = vdwg.mxu0
    %511 = vmatpush.bf16.msra.mxu0 %v406
    %512 = vmatpush.bf16.msra.mxu0 %v404
    %513 = vmatpush.bf16.msra.mxu0 %v402
    %514 = vmatpush.bf16.msra.mxu0 %v400
    %515 = vmatpush.bf16.msra.mxu0 %v398
    %516 = vmatpush.bf16.msra.mxu0 %v396
    %517 = vmatpush.bf16.msra.mxu0 %v394
    %518 = vmatpush.bf16.msra.mxu0 %v392
    %519 = vmatmul.bf16.gmra.mxu0 %v81
    %v520 = vpop.f32.mrf.mxu0
    %v521 = vadd.f32 %v508, %v520
    %v522 = vpop.f32.mrf.mxu0
    %523 = vdwg.mxu0
    %524 = vmatpush.bf16.msra.mxu0 %v359
    %525 = vmatpush.bf16.msra.mxu0 %v357
    %526 = vmatpush.bf16.msra.mxu0 %v355
    %527 = vmatpush.bf16.msra.mxu0 %v353
    %528 = vmatpush.bf16.msra.mxu0 %v351
    %529 = vmatpush.bf16.msra.mxu0 %v349
    %530 = vmatpush.bf16.msra.mxu0 %v347
    %531 = vmatpush.bf16.msra.mxu0 %v345
    %532 = vmatmul.bf16.gmra.mxu0 %v78
    %v533 = vpop.f32.mrf.mxu0
    %v534 = vadd.f32 %v149, %v533
    %v535 = vpop.f32.mrf.mxu0
    %536 = vdwg.mxu0
    %537 = vmatpush.bf16.msra.mxu0 %v375
    %538 = vmatpush.bf16.msra.mxu0 %v373
    %539 = vmatpush.bf16.msra.mxu0 %v371
    %540 = vmatpush.bf16.msra.mxu0 %v369
    %541 = vmatpush.bf16.msra.mxu0 %v367
    %542 = vmatpush.bf16.msra.mxu0 %v365
    %543 = vmatpush.bf16.msra.mxu0 %v363
    %544 = vmatpush.bf16.msra.mxu0 %v361
    %545 = vmatmul.bf16.gmra.mxu0 %v79
    %v546 = vpop.f32.mrf.mxu0
    %v547 = vadd.f32 %v534, %v546
    %v548 = vpop.f32.mrf.mxu0
    %549 = vdwg.mxu0
    %550 = vmatpush.bf16.msra.mxu0 %v391
    %551 = vmatpush.bf16.msra.mxu0 %v389
    %552 = vmatpush.bf16.msra.mxu0 %v387
    %553 = vmatpush.bf16.msra.mxu0 %v385
    %554 = vmatpush.bf16.msra.mxu0 %v383
    %555 = vmatpush.bf16.msra.mxu0 %v381
    %556 = vmatpush.bf16.msra.mxu0 %v379
    %557 = vmatpush.bf16.msra.mxu0 %v377
    %558 = vmatmul.bf16.gmra.mxu0 %v80
    %v559 = vpop.f32.mrf.mxu0
    %v560 = vadd.f32 %v547, %v559
    %v561 = vpop.f32.mrf.mxu0
    %562 = vdwg.mxu0
    %563 = vmatpush.bf16.msra.mxu0 %v407
    %564 = vmatpush.bf16.msra.mxu0 %v405
    %565 = vmatpush.bf16.msra.mxu0 %v403
    %566 = vmatpush.bf16.msra.mxu0 %v401
    %567 = vmatpush.bf16.msra.mxu0 %v399
    %568 = vmatpush.bf16.msra.mxu0 %v397
    %569 = vmatpush.bf16.msra.mxu0 %v395
    %570 = vmatpush.bf16.msra.mxu0 %v393
    %571 = vmatmul.bf16.gmra.mxu0 %v81
    %v572 = vpop.f32.mrf.mxu0
    %v573 = vadd.f32 %v560, %v572
    %v574 = vpop.f32.mrf.mxu0
    %575 = vdwg.mxu0
    %v576 = vmax.f32 %v521, 0.0
    %v577 = vmax.f32 %v573, 0.0
    %v578 = vpack.c.bf16 %v576, %v576
    %v579 = vpack.c.bf16 %v577, %v577
    %v580 = vld [vmem:[#allocation8] sm:$0xf]
    %v581 = vld [vmem:[#allocation8 + $0x4] sm:$0xf]
    %v582 = vld [vmem:[#allocation8 + $0x8] sm:$0xf]
    %v583 = vld [vmem:[#allocation8 + $0xc] sm:$0xf]
    %v584 = vld [vmem:[#allocation8 + $0x10] sm:$0xf]
    %v585 = vld [vmem:[#allocation8 + $0x14] sm:$0xf]
    %v586 = vld [vmem:[#allocation8 + $0x18] sm:$0xf]
    %v587 = vld [vmem:[#allocation8 + $0x1c] sm:$0xf]
    %v588 = vld [vmem:[#allocation8 + $0x20] sm:$0xf]
    %v589 = vld [vmem:[#allocation8 + $0x24] sm:$0xf]
    %v590 = vld [vmem:[#allocation8 + $0x28] sm:$0xf]
    %v591 = vld [vmem:[#allocation8 + $0x2c] sm:$0xf]
    %v592 = vld [vmem:[#allocation8 + $0x30] sm:$0xf]
    %v593 = vld [vmem:[#allocation8 + $0x34] sm:$0xf]
    %v594 = vld [vmem:[#allocation8 + $0x38] sm:$0xf]
    %v595 = vld [vmem:[#allocation8 + $0x3c] sm:$0xf]
    %v596 = vld [vmem:[#allocation8 + $0x40] sm:$0xf]
    %v597 = vld [vmem:[#allocation8 + $0x44] sm:$0xf]
    %v598 = vld [vmem:[#allocation8 + $0x48] sm:$0xf]
    %v599 = vld [vmem:[#allocation8 + $0x4c] sm:$0xf]
    %v600 = vld [vmem:[#allocation8 + $0x50] sm:$0xf]
    %v601 = vld [vmem:[#allocation8 + $0x54] sm:$0xf]
    %v602 = vld [vmem:[#allocation8 + $0x58] sm:$0xf]
    %v603 = vld [vmem:[#allocation8 + $0x5c] sm:$0xf]
    %v604 = vld [vmem:[#allocation8 + $0x60] sm:$0xf]
    %v605 = vld [vmem:[#allocation8 + $0x64] sm:$0xf]
    %v606 = vld [vmem:[#allocation8 + $0x68] sm:$0xf]
    %v607 = vld [vmem:[#allocation8 + $0x6c] sm:$0xf]
    %v608 = vld [vmem:[#allocation8 + $0x70] sm:$0xf]
    %v609 = vld [vmem:[#allocation8 + $0x74] sm:$0xf]
    %v610 = vld [vmem:[#allocation8 + $0x78] sm:$0xf]
    %v611 = vld [vmem:[#allocation8 + $0x7c] sm:$0xf]
    %v612 = vld [vmem:[%s4] sm:$0x1]
    %v614 = vperm.slane %v612, 0
    %v648 = vunpack.c.l.b16 %v580
    %v649 = vunpack.c.l.b16 %v581
    %v650 = vunpack.c.l.b16 %v582
    %v651 = vunpack.c.l.b16 %v583
    %v652 = vunpack.c.l.b16 %v584
    %v653 = vunpack.c.l.b16 %v585
    %v654 = vunpack.c.l.b16 %v586
    %v655 = vunpack.c.l.b16 %v587
    %v656 = vunpack.c.l.b16 %v588
    %v657 = vunpack.c.l.b16 %v589
    %v658 = vunpack.c.l.b16 %v590
    %v659 = vunpack.c.l.b16 %v591
    %v660 = vunpack.c.l.b16 %v592
    %v661 = vunpack.c.l.b16 %v593
    %v662 = vunpack.c.l.b16 %v594
    %v663 = vunpack.c.l.b16 %v595
    %v664 = vunpack.c.l.b16 %v596
    %v665 = vunpack.c.l.b16 %v597
    %v666 = vunpack.c.l.b16 %v598
    %v667 = vunpack.c.l.b16 %v599
    %v668 = vunpack.c.l.b16 %v600
    %v669 = vunpack.c.l.b16 %v601
    %v670 = vunpack.c.l.b16 %v602
    %v671 = vunpack.c.l.b16 %v603
    %v672 = vunpack.c.l.b16 %v604
    %v673 = vunpack.c.l.b16 %v605
    %v674 = vunpack.c.l.b16 %v606
    %v675 = vunpack.c.l.b16 %v607
    %v676 = vunpack.c.l.b16 %v608
    %v677 = vunpack.c.l.b16 %v609
    %v678 = vunpack.c.l.b16 %v610
    %v679 = vunpack.c.l.b16 %v611
    %v680 = vpack.c.b16 %v649, %v648
    %v681 = vpack.c.b16 %v651, %v650
    %v682 = vpack.c.b16 %v653, %v652
    %v683 = vpack.c.b16 %v655, %v654
    %v684 = vpack.c.b16 %v657, %v656
    %v685 = vpack.c.b16 %v659, %v658
    %v686 = vpack.c.b16 %v661, %v660
    %v687 = vpack.c.b16 %v663, %v662
    %v688 = vpack.c.b16 %v665, %v664
    %v689 = vpack.c.b16 %v667, %v666
    %v690 = vpack.c.b16 %v669, %v668
    %v691 = vpack.c.b16 %v671, %v670
    %v692 = vpack.c.b16 %v673, %v672
    %v693 = vpack.c.b16 %v675, %v674
    %v694 = vpack.c.b16 %v677, %v676
    %v695 = vpack.c.b16 %v679, %v678
    %712 = vmatpush.bf16.msra.mxu0 %v687
    %713 = vmatpush.bf16.msra.mxu0 %v686
    %714 = vmatpush.bf16.msra.mxu0 %v685
    %715 = vmatpush.bf16.msra.mxu0 %v684
    %716 = vmatpush.bf16.msra.mxu0 %v683
    %717 = vmatpush.bf16.msra.mxu0 %v682
    %718 = vmatpush.bf16.msra.mxu0 %v681
    %719 = vmatpush.bf16.msra.mxu0 %v680
    %720 = vmatmul.bf16.gmra.mxu0 %v578
    %v721 = vpop.f32.mrf.mxu0
    %v722 = vadd.f32 %v614, %v721
    %v723 = vpop.f32.mrf.mxu0
    %724 = vdwg.mxu0
    %725 = vmatpush.bf16.msra.mxu0 %v695
    %726 = vmatpush.bf16.msra.mxu0 %v694
    %727 = vmatpush.bf16.msra.mxu0 %v693
    %728 = vmatpush.bf16.msra.mxu0 %v692
    %729 = vmatpush.bf16.msra.mxu0 %v691
    %730 = vmatpush.bf16.msra.mxu0 %v690
    %731 = vmatpush.bf16.msra.mxu0 %v689
    %732 = vmatpush.bf16.msra.mxu0 %v688
    %733 = vmatmul.bf16.gmra.mxu0 %v579
    %v734 = vpop.f32.mrf.mxu0
    %v735 = vadd.f32 %v722, %v734
    %v736 = vpop.f32.mrf.mxu0
    %737 = vdwg.mxu0
    %v738 = vmax.f32 %v735, 0.0
    %v739 = vpack.c.bf16 %v738, %v738
    %v740 = vld [vmem:[%s5] sm:$0x1]
    %s741 = sld [smem:[#allocation2]]
    %v742 = vstv %s741
    %743 = vmatpush.bf16.xpose.msra.mxu0 0
    %744 = vmatpush.bf16.xpose.msra.mxu0 0
    %745 = vmatpush.bf16.xpose.msra.mxu0 0
    %746 = vmatpush.bf16.xpose.msra.mxu0 0
    %747 = vmatpush.bf16.xpose.msra.mxu0 0
    %748 = vmatpush.bf16.xpose.msra.mxu0 0
    %749 = vmatpush.bf16.xpose.msra.mxu0 0
    %750 = vmatpush.bf16.xpose.msra.mxu0 %v739
    %751 = vmatmul.bf16.gmra.mxu0 %v740
    %v752 = vpop.f32.mrf.mxu0
    %v753 = vadd.f32 %v742, %v752
    %v754 = vpop.f32.mrf.mxu0
    %755 = vdwg.mxu0
    %v756 = vxor.u32 %v753, 2147483648
    %v757 = vmul.f32 %v756, 1.442695
    %v758 = vpow.pop %v757
    %v759 = vadd.f32 %v758, 1.0
    %v760 = vrcp.pop %v759
    %v761 = vmul.f32 %v759, %v760
    %v762 = vsub.f32 1.0, %v761
    %v763 = vmul.f32 %v760, %v762
    %v764 = vadd.f32 %v760, %v763
    %vm765 = vweird.f32 %v759
    %vm766 = vweird.f32 %v760
    %vm767 = vmor %vm765, %vm766
    %v768 = vsel %vm767, %v760, %v764
    %v769 = vand.u32 2147483647, %v759
    %vm770 = vcmp.eq.f32.partialorder %v769, 8.507059e+37
    %v771 = vand.u32 %v759, 2147483648
    %v772 = vor.u32 1.1754944e-38, %v771
    %v773 = vsel %vm770, %v772, %v768
    %v774 = vmul.f32 1.0, %v773
    %vm775 = vcmask 57344
    %776 = vst.msk [vmem:[#allocation9] sm:$0x1] %vm775, %v774
    // Predicated region
    $region42: #{tpu_custom_call.1} parent=1 // pred_check
      _
    $region43: #{tpu_custom_call.1} parent=1 // pred_check_branch
      %778 = sbr.rel (0) target = $region45
    $region44: #{tpu_custom_call.1} parent=1 // pred_region
      %780 = vsyncadd [#allocation5], 0
      %s782 = sshll.u32 [#allocation9], 4
      %s783 = int_to_ptr.vmem [resolvable:$true] %s782
      %s784 = sshll.u32 %s7, 4
      %s785 = int_to_ptr.hbm [resolvable:$true] %s784
      %787 = dma.vmem_to_hbm [thread:$0]  %s783, 16, %s785, [#allocation5]
    $region45: #{tpu_custom_call.1} parent=1 // pred_fallthru
      _
    // Predicated region
    $region46: #{tpu_custom_call.1} parent=1 // pred_check
      _
    $region47: #{tpu_custom_call.1} parent=1 // pred_check_branch
      %789 = sbr.rel (0) target = $region49
    $region48: #{tpu_custom_call.1} parent=1 // pred_region
      %791 = dma.done [#allocation5], 16
    $region49: #{tpu_custom_call.1} parent=1 // pred_fallthru
      _
    %792 = vsyncpa [#allocation4], 1
    %793 = vsyncpa [#allocation7], 1
    %794 = vsyncpa [#allocation5], 1

</llo_original>
